<compile_context>
chip_gen: v5e
topology: v5e:2x2
jax: 0.10.0
libtpu: 0.0.40
codegen_flags: <defaults>
</compile_context>

<pallas_src>
import functools

import numpy as np

import jax
import jax.numpy as jnp
from jax.experimental import pallas as pl
from jax.experimental.pallas import tpu as pltpu


# ----------------------------------------------------------------------------
# Fused kernel: single invocation, whole batch.
#   alphas_ref : SMEM (num_layers,) f32
#   gan_ref    : VMEM (B*S, F) f32
#   vae_ref    : VMEM (B*S, F) f32
#   w_ref      : VMEM packed weight slab (num_weights*F + padded_bias_rows, F):
#                rows [4L+0..4L+3]*F : Wq,Wk,Wv,Wo of layer L  (Wq pre-scaled by
#                1/sqrt(hd), Wo pre-scaled by (1-alpha))
#                rows [4*num_layers..+1]*F : refine W1, W2
#                trailing bias block (one (1,F) row per bias, same order,
#                zero-padded to a multiple of 8 rows)
# ----------------------------------------------------------------------------
def _fused_kernel(alphas_ref, gan_ref, vae_ref, w_ref, out_ref, *,
                  batch, seq_len, feature_dim, num_heads, num_layers):
    B, S, F, H = batch, seq_len, feature_dim, num_heads
    hd = F // H
    nw = 4 * num_layers + 2                      # number of (F, F) matrices
    n_bias_rows = ((nw + 7) // 8) * 8            # padded bias-block height

    gan = gan_ref[...]                           # (B*S, F)
    vae = vae_ref[...]                           # (B*S, F)

    def W(i):                                    # i-th (F, F) weight (static slice)
        return w_ref[pl.ds(i * F, F), :]

    bias_blk = w_ref[pl.ds(nw * F, n_bias_rows), :]   # (padded, F), one load

    def bias(j):                                 # j-th bias as a (1, F) row
        return bias_blk[j:j + 1, :]

    def mha(x, wq, wk, wv, wo, bq, bk, bv, bo, alpha):
        # Full-width projections: one (B*S,F)x(F,F) MXU matmul each.
        q = jnp.dot(x, wq, preferred_element_type=jnp.float32) + bq
        k = jnp.dot(vae, wk, preferred_element_type=jnp.float32) + bk
        v = jnp.dot(vae, wv, preferred_element_type=jnp.float32) + bv

        # Per-(batch, head) attention core on (S, hd) slices; static unroll.
        ctx_rows = []
        for b in range(B):
            r0, r1 = b * S, (b + 1) * S
            head_ctx = []
            for h in range(H):
                c0, c1 = h * hd, (h + 1) * hd
                qbh = q[r0:r1, c0:c1]            # (S, hd)
                kbh = k[r0:r1, c0:c1]
                vbh = v[r0:r1, c0:c1]
                # scores = (q / sqrt(hd)) . k^T  (scale folded into wq/bq)
                s = jnp.einsum('qd,kd->qk', qbh, kbh,
                               preferred_element_type=jnp.float32)
                s = s - jnp.max(s, axis=-1, keepdims=True)
                p = jnp.exp(s)
                p = p * pl.reciprocal(jnp.sum(p, axis=-1, keepdims=True),
                                      approx=True)
                # TODO(synk): Dropout(0.1) on p treated as identity (eval mode).
                head_ctx.append(jnp.dot(p, vbh,
                                        preferred_element_type=jnp.float32))
            ctx_rows.append(jnp.concatenate(head_ctx, axis=-1))   # (S, F)
        ctx = jnp.concatenate(ctx_rows, axis=0)                   # (B*S, F)

        # Single full-width output projection; (1 - alpha) folded into wo/bo.
        out = jnp.dot(ctx, wo, preferred_element_type=jnp.float32) + bo
        return alpha * x + out

    # Layer stack: layer 0 on (gan, vae); later layers on (fused, vae).
    x = gan
    for L in range(num_layers):
        x = mha(x, W(4 * L), W(4 * L + 1), W(4 * L + 2), W(4 * L + 3),
                bias(4 * L), bias(4 * L + 1), bias(4 * L + 2), bias(4 * L + 3),
                alphas_ref[L])

    # Feature-refinement MLP + final residual, still fused.
    iw = 4 * num_layers
    h1 = jnp.dot(x, W(iw), preferred_element_type=jnp.float32) + bias(iw)
    h1 = jnp.maximum(h1, 0.0)
    o = jnp.dot(h1, W(iw + 1), preferred_element_type=jnp.float32) + bias(iw + 1)
    out_ref[...] = o + 0.5 * (gan + vae)


# ----------------------------------------------------------------------------
# Wrapper: pack weights into one slab (trace-time), collapse grid, one call.
# ----------------------------------------------------------------------------
def _prep_params(params, num_heads):
    """One-time layout plumbing: single contiguous weight slab + scale folds."""
    F = params["refine"]["w1"].shape[0]
    hd = F // num_heads
    scale = 1.0 / (hd ** 0.5)

    weights, biases, alphas = [], [], []
    for lp in params["layers"]:
        a = lp["alpha"].astype(jnp.float32)
        alphas.append(a)
        weights += [lp["wq"] * scale, lp["wk"], lp["wv"], lp["wo"] * (1.0 - a)]
        biases += [lp["bq"] * scale, lp["bk"], lp["bv"], lp["bo"] * (1.0 - a)]
    rp = params["refine"]
    weights += [rp["w1"], rp["w2"]]
    biases += [rp["b1"], rp["b2"]]

    bias_rows = jnp.stack(biases).astype(jnp.float32)             # (n_bias, F)
    pad = (-bias_rows.shape[0]) % 8
    if pad:
        bias_rows = jnp.concatenate(
            [bias_rows, jnp.zeros((pad, F), jnp.float32)], axis=0)
    slab = jnp.concatenate(
        [jnp.concatenate([w.astype(jnp.float32) for w in weights], axis=0),
         bias_rows], axis=0)                                       # (nw*F + pad, F)
    return jnp.stack(alphas).astype(jnp.float32), slab


def sign_sequence_fuser(gan_seq, vae_seq, params, num_heads=2):
    """Full SignSequenceFuser forward as one fused Pallas kernel invocation."""
    B, S, F = gan_seq.shape
    num_layers = len(params["layers"])
    assert F % num_heads == 0
    alphas, slab = _prep_params(params, num_heads)

    # Flatten batch into the sublane dim outside the kernel (free HBM reshape).
    gan2 = gan_seq.reshape(B * S, F).astype(jnp.float32)
    vae2 = vae_seq.reshape(B * S, F).astype(jnp.float32)

    kern = functools.partial(_fused_kernel, batch=B, seq_len=S,
                             feature_dim=F, num_heads=num_heads,
                             num_layers=num_layers)
    out2 = pl.pallas_call(
        kern,
        out_shape=jax.ShapeDtypeStruct((B * S, F), jnp.float32),
        in_specs=[pl.BlockSpec(memory_space=pltpu.MemorySpace.SMEM),   # alphas
                  pl.BlockSpec(memory_space=pltpu.MemorySpace.VMEM),   # gan
                  pl.BlockSpec(memory_space=pltpu.MemorySpace.VMEM),   # vae
                  pl.BlockSpec(memory_space=pltpu.MemorySpace.VMEM)],  # slab
        out_specs=pl.BlockSpec(memory_space=pltpu.MemorySpace.VMEM),
    )(alphas, gan2, vae2, slab)
    return out2.reshape(B, S, F)


# ----------------------------------------------------------------------------
# Deterministic parameter init (weights stored as (in, out); biases as (F,))
# ----------------------------------------------------------------------------
def init_params(key, feature_dim, num_layers=2):
    def lin(k, scale=0.05):
        kw, kb = jax.random.split(k)
        w = scale * jax.random.normal(kw, (feature_dim, feature_dim), jnp.float32)
        b = scale * jax.random.normal(kb, (feature_dim,), jnp.float32)
        return w, b

    layers = []
    for _ in range(num_layers):
        key, k1, k2, k3, k4 = jax.random.split(key, 5)
        wq, bq = lin(k1)
        wk, bk = lin(k2)
        wv, bv = lin(k3)
        wo, bo = lin(k4)
        layers.append(dict(wq=wq, bq=bq, wk=wk, bk=bk, wv=wv, bv=bv,
                           wo=wo, bo=bo, alpha=jnp.array(0.5, jnp.float32)))
    key, k5, k6 = jax.random.split(key, 3)
    w1, b1 = lin(k5)
    w2, b2 = lin(k6)
    return dict(layers=layers, refine=dict(w1=w1, b1=b1, w2=w2, b2=b2))


# ----------------------------------------------------------------------------
# Pure-JAX reference (mirrors the PyTorch forward) for a sanity check
# ----------------------------------------------------------------------------
def reference_forward(gan_seq, vae_seq, params, num_heads):
    B, S, F = gan_seq.shape
    hd = F // num_heads

    def mha(x, y, lp):
        q = x @ lp["wq"] + lp["bq"]
        k = y @ lp["wk"] + lp["bk"]
        v = y @ lp["wv"] + lp["bv"]

        def split(t):  # (B,S,F) -> (B,H,S,hd)
            return t.reshape(B, S, num_heads, hd).transpose(0, 2, 1, 3)

        qh, kh, vh = split(q), split(k), split(v)
        s = jnp.einsum("bhqd,bhkd->bhqk", qh, kh) / (hd ** 0.5)
        p = jax.nn.softmax(s, axis=-1)
        ctx = jnp.einsum("bhqk,bhkd->bhqd", p, vh)
        ctx = ctx.transpose(0, 2, 1, 3).reshape(B, S, F)
        out = ctx @ lp["wo"] + lp["bo"]
        return lp["alpha"] * x + (1 - lp["alpha"]) * out

    fused = mha(gan_seq, vae_seq, params["layers"][0])
    for lp in params["layers"][1:]:
        fused = mha(fused, vae_seq, lp)
    rp = params["refine"]
    h = jax.nn.relu(fused @ rp["w1"] + rp["b1"])
    o = h @ rp["w2"] + rp["b2"]
    return o + 0.5 * (gan_seq + vae_seq)


if __name__ == "__main__":
    B, S, F = 2, 8, 32          # batch, seq_len, feature_dim
    NUM_HEADS = 2

    key = jax.random.PRNGKey(0)
    k_gan, k_vae, k_par = jax.random.split(key, 3)
    gan_seq = jax.random.normal(k_gan, (B, S, F), jnp.float32)
    vae_seq = jax.random.normal(k_vae, (B, S, F), jnp.float32)
    params = init_params(k_par, F, num_layers=2)

    out = sign_sequence_fuser(gan_seq, vae_seq, params, num_heads=NUM_HEADS)
    out = jax.block_until_ready(out)
    assert out.shape == (B, S, F) and out.dtype == jnp.float32

    ref = reference_forward(gan_seq, vae_seq, params, NUM_HEADS)
    np.testing.assert_allclose(np.asarray(out), np.asarray(ref),
                               rtol=1e-2, atol=1e-2)
    print("KERNEL_OK")
</pallas_src>

<mosaic_0001>
module attributes {stable_mosaic.version = 11 : i64} {
  func.func @_fused_kernel(%arg0: memref<2xf32, #tpu.memory_space<smem>>, %arg1: memref<16x32xf32, #tpu.memory_space<vmem>>, %arg2: memref<16x32xf32, #tpu.memory_space<vmem>>, %arg3: memref<336x32xf32, #tpu.memory_space<vmem>>, %arg4: memref<16x32xf32, #tpu.memory_space<vmem>>) attributes {dimension_semantics = [], scalar_prefetch = 0 : i64, scratch_operands = 0 : i64, tpu.core_type = #tpu.core_type<tc>} {
    %c0 = arith.constant 0 : index
    %c0_0 = arith.constant 0 : index
    %0 = vector.load %arg1[%c0, %c0_0] : memref<16x32xf32, #tpu.memory_space<vmem>>, vector<16x32xf32>
    %c0_1 = arith.constant 0 : index
    %c0_2 = arith.constant 0 : index
    %1 = vector.load %arg2[%c0_1, %c0_2] : memref<16x32xf32, #tpu.memory_space<vmem>>, vector<16x32xf32>
    %c320 = arith.constant 320 : index
    %c0_3 = arith.constant 0 : index
    %2 = vector.load %arg3[%c320, %c0_3] : memref<336x32xf32, #tpu.memory_space<vmem>>, vector<16x32xf32>
    %c0_4 = arith.constant 0 : index
    %c0_5 = arith.constant 0 : index
    %3 = vector.load %arg3[%c0_4, %c0_5] : memref<336x32xf32, #tpu.memory_space<vmem>>, vector<32x32xf32>
    %c32 = arith.constant 32 : index
    %c0_6 = arith.constant 0 : index
    %4 = vector.load %arg3[%c32, %c0_6] : memref<336x32xf32, #tpu.memory_space<vmem>>, vector<32x32xf32>
    %c64 = arith.constant 64 : index
    %c0_7 = arith.constant 0 : index
    %5 = vector.load %arg3[%c64, %c0_7] : memref<336x32xf32, #tpu.memory_space<vmem>>, vector<32x32xf32>
    %c96 = arith.constant 96 : index
    %c0_8 = arith.constant 0 : index
    %6 = vector.load %arg3[%c96, %c0_8] : memref<336x32xf32, #tpu.memory_space<vmem>>, vector<32x32xf32>
    %7 = vector.extract_strided_slice %2 {offsets = [0, 0], sizes = [1, 32], strides = [1, 1]} : vector<16x32xf32> to vector<1x32xf32>
    %8 = vector.extract_strided_slice %2 {offsets = [1, 0], sizes = [1, 32], strides = [1, 1]} : vector<16x32xf32> to vector<1x32xf32>
    %9 = vector.extract_strided_slice %2 {offsets = [2, 0], sizes = [1, 32], strides = [1, 1]} : vector<16x32xf32> to vector<1x32xf32>
    %10 = vector.extract_strided_slice %2 {offsets = [3, 0], sizes = [1, 32], strides = [1, 1]} : vector<16x32xf32> to vector<1x32xf32>
    %c0_9 = arith.constant 0 : index
    %11 = memref.load %arg0[%c0_9] : memref<2xf32, #tpu.memory_space<smem>>
    %cst = arith.constant dense<0.000000e+00> : vector<16x32xf32>
    %12 = tpu.matmul %0, %3, %cst {dimension_numbers = #tpu.dot_dimension_numbers<[1], [0], [0], [1], [0, 0, 1, 1], [], []>} : vector<16x32xf32>, vector<32x32xf32>, vector<16x32xf32> -> vector<16x32xf32>
    %13 = vector.broadcast %7 : vector<1x32xf32> to vector<16x32xf32>
    %14 = arith.addf %12, %13 : vector<16x32xf32>
    %cst_10 = arith.constant dense<0.000000e+00> : vector<16x32xf32>
    %15 = tpu.matmul %1, %4, %cst_10 {dimension_numbers = #tpu.dot_dimension_numbers<[1], [0], [0], [1], [0, 0, 1, 1], [], []>} : vector<16x32xf32>, vector<32x32xf32>, vector<16x32xf32> -> vector<16x32xf32>
    %16 = vector.broadcast %8 : vector<1x32xf32> to vector<16x32xf32>
    %17 = arith.addf %15, %16 : vector<16x32xf32>
    %cst_11 = arith.constant dense<0.000000e+00> : vector<16x32xf32>
    %18 = tpu.matmul %1, %5, %cst_11 {dimension_numbers = #tpu.dot_dimension_numbers<[1], [0], [0], [1], [0, 0, 1, 1], [], []>} : vector<16x32xf32>, vector<32x32xf32>, vector<16x32xf32> -> vector<16x32xf32>
    %19 = vector.broadcast %9 : vector<1x32xf32> to vector<16x32xf32>
    %20 = arith.addf %18, %19 : vector<16x32xf32>
    %21 = vector.extract_strided_slice %14 {offsets = [0, 0], sizes = [8, 16], strides = [1, 1]} : vector<16x32xf32> to vector<8x16xf32>
    %22 = vector.extract_strided_slice %17 {offsets = [0, 0], sizes = [8, 16], strides = [1, 1]} : vector<16x32xf32> to vector<8x16xf32>
    %23 = vector.extract_strided_slice %20 {offsets = [0, 0], sizes = [8, 16], strides = [1, 1]} : vector<16x32xf32> to vector<8x16xf32>
    "tpu.trace_start"() <{level = 10 : i32, message = "qd,kd->qk"}> : () -> ()
    %cst_12 = arith.constant dense<0.000000e+00> : vector<8x8xf32>
    %24 = tpu.matmul %21, %22, %cst_12 {dimension_numbers = #tpu.dot_dimension_numbers<[1], [1], [0], [0], [0, 0, 1, 0], [], []>} : vector<8x16xf32>, vector<8x16xf32>, vector<8x8xf32> -> vector<8x8xf32>
    "tpu.trace_stop"() : () -> ()
    %cst_13 = arith.constant dense<0xFF800000> : vector<8xf32>
    %25 = vector.multi_reduction <maximumf>, %24, %cst_13 [1] : vector<8x8xf32> to vector<8xf32>
    %26 = vector.shape_cast %25 : vector<8xf32> to vector<8x1xf32>
    %27 = vector.broadcast %26 : vector<8x1xf32> to vector<8x8xf32>
    %28 = arith.subf %24, %27 : vector<8x8xf32>
    %29 = math.exp %28 : vector<8x8xf32>
    %cst_14 = arith.constant dense<0.000000e+00> : vector<8xf32>
    %30 = vector.multi_reduction <add>, %29, %cst_14 [1] : vector<8x8xf32> to vector<8xf32>
    %31 = vector.shape_cast %30 : vector<8xf32> to vector<8x1xf32>
    %32 = tpu.reciprocal %31 {approx = true} : vector<8x1xf32> -> vector<8x1xf32>
    %33 = vector.broadcast %32 : vector<8x1xf32> to vector<8x8xf32>
    %34 = arith.mulf %29, %33 : vector<8x8xf32>
    %cst_15 = arith.constant dense<0.000000e+00> : vector<8x16xf32>
    %35 = tpu.matmul %34, %23, %cst_15 {dimension_numbers = #tpu.dot_dimension_numbers<[1], [0], [0], [1], [0, 0, 1, 1], [], []>} : vector<8x8xf32>, vector<8x16xf32>, vector<8x16xf32> -> vector<8x16xf32>
    %36 = vector.extract_strided_slice %14 {offsets = [0, 16], sizes = [8, 16], strides = [1, 1]} : vector<16x32xf32> to vector<8x16xf32>
    %37 = vector.extract_strided_slice %17 {offsets = [0, 16], sizes = [8, 16], strides = [1, 1]} : vector<16x32xf32> to vector<8x16xf32>
    %38 = vector.extract_strided_slice %20 {offsets = [0, 16], sizes = [8, 16], strides = [1, 1]} : vector<16x32xf32> to vector<8x16xf32>
    "tpu.trace_start"() <{level = 10 : i32, message = "qd,kd->qk"}> : () -> ()
    %cst_16 = arith.constant dense<0.000000e+00> : vector<8x8xf32>
    %39 = tpu.matmul %36, %37, %cst_16 {dimension_numbers = #tpu.dot_dimension_numbers<[1], [1], [0], [0], [0, 0, 1, 0], [], []>} : vector<8x16xf32>, vector<8x16xf32>, vector<8x8xf32> -> vector<8x8xf32>
    "tpu.trace_stop"() : () -> ()
    %cst_17 = arith.constant dense<0xFF800000> : vector<8xf32>
    %40 = vector.multi_reduction <maximumf>, %39, %cst_17 [1] : vector<8x8xf32> to vector<8xf32>
    %41 = vector.shape_cast %40 : vector<8xf32> to vector<8x1xf32>
    %42 = vector.broadcast %41 : vector<8x1xf32> to vector<8x8xf32>
    %43 = arith.subf %39, %42 : vector<8x8xf32>
    %44 = math.exp %43 : vector<8x8xf32>
    %cst_18 = arith.constant dense<0.000000e+00> : vector<8xf32>
    %45 = vector.multi_reduction <add>, %44, %cst_18 [1] : vector<8x8xf32> to vector<8xf32>
    %46 = vector.shape_cast %45 : vector<8xf32> to vector<8x1xf32>
    %47 = tpu.reciprocal %46 {approx = true} : vector<8x1xf32> -> vector<8x1xf32>
    %48 = vector.broadcast %47 : vector<8x1xf32> to vector<8x8xf32>
    %49 = arith.mulf %44, %48 : vector<8x8xf32>
    %cst_19 = arith.constant dense<0.000000e+00> : vector<8x16xf32>
    %50 = tpu.matmul %49, %38, %cst_19 {dimension_numbers = #tpu.dot_dimension_numbers<[1], [0], [0], [1], [0, 0, 1, 1], [], []>} : vector<8x8xf32>, vector<8x16xf32>, vector<8x16xf32> -> vector<8x16xf32>
    %51 = tpu.concatenate %35, %50 in 1 : vector<8x16xf32>, vector<8x16xf32> -> vector<8x32xf32>
    %52 = vector.extract_strided_slice %14 {offsets = [8, 0], sizes = [8, 16], strides = [1, 1]} : vector<16x32xf32> to vector<8x16xf32>
    %53 = vector.extract_strided_slice %17 {offsets = [8, 0], sizes = [8, 16], strides = [1, 1]} : vector<16x32xf32> to vector<8x16xf32>
    %54 = vector.extract_strided_slice %20 {offsets = [8, 0], sizes = [8, 16], strides = [1, 1]} : vector<16x32xf32> to vector<8x16xf32>
    "tpu.trace_start"() <{level = 10 : i32, message = "qd,kd->qk"}> : () -> ()
    %cst_20 = arith.constant dense<0.000000e+00> : vector<8x8xf32>
    %55 = tpu.matmul %52, %53, %cst_20 {dimension_numbers = #tpu.dot_dimension_numbers<[1], [1], [0], [0], [0, 0, 1, 0], [], []>} : vector<8x16xf32>, vector<8x16xf32>, vector<8x8xf32> -> vector<8x8xf32>
    "tpu.trace_stop"() : () -> ()
    %cst_21 = arith.constant dense<0xFF800000> : vector<8xf32>
    %56 = vector.multi_reduction <maximumf>, %55, %cst_21 [1] : vector<8x8xf32> to vector<8xf32>
    %57 = vector.shape_cast %56 : vector<8xf32> to vector<8x1xf32>
    %58 = vector.broadcast %57 : vector<8x1xf32> to vector<8x8xf32>
    %59 = arith.subf %55, %58 : vector<8x8xf32>
    %60 = math.exp %59 : vector<8x8xf32>
    %cst_22 = arith.constant dense<0.000000e+00> : vector<8xf32>
    %61 = vector.multi_reduction <add>, %60, %cst_22 [1] : vector<8x8xf32> to vector<8xf32>
    %62 = vector.shape_cast %61 : vector<8xf32> to vector<8x1xf32>
    %63 = tpu.reciprocal %62 {approx = true} : vector<8x1xf32> -> vector<8x1xf32>
    %64 = vector.broadcast %63 : vector<8x1xf32> to vector<8x8xf32>
    %65 = arith.mulf %60, %64 : vector<8x8xf32>
    %cst_23 = arith.constant dense<0.000000e+00> : vector<8x16xf32>
    %66 = tpu.matmul %65, %54, %cst_23 {dimension_numbers = #tpu.dot_dimension_numbers<[1], [0], [0], [1], [0, 0, 1, 1], [], []>} : vector<8x8xf32>, vector<8x16xf32>, vector<8x16xf32> -> vector<8x16xf32>
    %67 = vector.extract_strided_slice %14 {offsets = [8, 16], sizes = [8, 16], strides = [1, 1]} : vector<16x32xf32> to vector<8x16xf32>
    %68 = vector.extract_strided_slice %17 {offsets = [8, 16], sizes = [8, 16], strides = [1, 1]} : vector<16x32xf32> to vector<8x16xf32>
    %69 = vector.extract_strided_slice %20 {offsets = [8, 16], sizes = [8, 16], strides = [1, 1]} : vector<16x32xf32> to vector<8x16xf32>
    "tpu.trace_start"() <{level = 10 : i32, message = "qd,kd->qk"}> : () -> ()
    %cst_24 = arith.constant dense<0.000000e+00> : vector<8x8xf32>
    %70 = tpu.matmul %67, %68, %cst_24 {dimension_numbers = #tpu.dot_dimension_numbers<[1], [1], [0], [0], [0, 0, 1, 0], [], []>} : vector<8x16xf32>, vector<8x16xf32>, vector<8x8xf32> -> vector<8x8xf32>
    "tpu.trace_stop"() : () -> ()
    %cst_25 = arith.constant dense<0xFF800000> : vector<8xf32>
    %71 = vector.multi_reduction <maximumf>, %70, %cst_25 [1] : vector<8x8xf32> to vector<8xf32>
    %72 = vector.shape_cast %71 : vector<8xf32> to vector<8x1xf32>
    %73 = vector.broadcast %72 : vector<8x1xf32> to vector<8x8xf32>
    %74 = arith.subf %70, %73 : vector<8x8xf32>
    %75 = math.exp %74 : vector<8x8xf32>
    %cst_26 = arith.constant dense<0.000000e+00> : vector<8xf32>
    %76 = vector.multi_reduction <add>, %75, %cst_26 [1] : vector<8x8xf32> to vector<8xf32>
    %77 = vector.shape_cast %76 : vector<8xf32> to vector<8x1xf32>
    %78 = tpu.reciprocal %77 {approx = true} : vector<8x1xf32> -> vector<8x1xf32>
    %79 = vector.broadcast %78 : vector<8x1xf32> to vector<8x8xf32>
    %80 = arith.mulf %75, %79 : vector<8x8xf32>
    %cst_27 = arith.constant dense<0.000000e+00> : vector<8x16xf32>
    %81 = tpu.matmul %80, %69, %cst_27 {dimension_numbers = #tpu.dot_dimension_numbers<[1], [0], [0], [1], [0, 0, 1, 1], [], []>} : vector<8x8xf32>, vector<8x16xf32>, vector<8x16xf32> -> vector<8x16xf32>
    %82 = tpu.concatenate %66, %81 in 1 : vector<8x16xf32>, vector<8x16xf32> -> vector<8x32xf32>
    %83 = tpu.concatenate %51, %82 in 0 : vector<8x32xf32>, vector<8x32xf32> -> vector<16x32xf32>
    %cst_28 = arith.constant dense<0.000000e+00> : vector<16x32xf32>
    %84 = tpu.matmul %83, %6, %cst_28 {dimension_numbers = #tpu.dot_dimension_numbers<[1], [0], [0], [1], [0, 0, 1, 1], [], []>} : vector<16x32xf32>, vector<32x32xf32>, vector<16x32xf32> -> vector<16x32xf32>
    %85 = vector.broadcast %10 : vector<1x32xf32> to vector<16x32xf32>
    %86 = arith.addf %84, %85 : vector<16x32xf32>
    %87 = vector.broadcast %11 : f32 to vector<16x32xf32>
    %88 = arith.mulf %87, %0 : vector<16x32xf32>
    %89 = arith.addf %88, %86 : vector<16x32xf32>
    %c128 = arith.constant 128 : index
    %c0_29 = arith.constant 0 : index
    %90 = vector.load %arg3[%c128, %c0_29] : memref<336x32xf32, #tpu.memory_space<vmem>>, vector<32x32xf32>
    %c160 = arith.constant 160 : index
    %c0_30 = arith.constant 0 : index
    %91 = vector.load %arg3[%c160, %c0_30] : memref<336x32xf32, #tpu.memory_space<vmem>>, vector<32x32xf32>
    %c192 = arith.constant 192 : index
    %c0_31 = arith.constant 0 : index
    %92 = vector.load %arg3[%c192, %c0_31] : memref<336x32xf32, #tpu.memory_space<vmem>>, vector<32x32xf32>
    %c224 = arith.constant 224 : index
    %c0_32 = arith.constant 0 : index
    %93 = vector.load %arg3[%c224, %c0_32] : memref<336x32xf32, #tpu.memory_space<vmem>>, vector<32x32xf32>
    %94 = vector.extract_strided_slice %2 {offsets = [4, 0], sizes = [1, 32], strides = [1, 1]} : vector<16x32xf32> to vector<1x32xf32>
    %95 = vector.extract_strided_slice %2 {offsets = [5, 0], sizes = [1, 32], strides = [1, 1]} : vector<16x32xf32> to vector<1x32xf32>
    %96 = vector.extract_strided_slice %2 {offsets = [6, 0], sizes = [1, 32], strides = [1, 1]} : vector<16x32xf32> to vector<1x32xf32>
    %97 = vector.extract_strided_slice %2 {offsets = [7, 0], sizes = [1, 32], strides = [1, 1]} : vector<16x32xf32> to vector<1x32xf32>
    %c1 = arith.constant 1 : index
    %98 = memref.load %arg0[%c1] : memref<2xf32, #tpu.memory_space<smem>>
    %cst_33 = arith.constant dense<0.000000e+00> : vector<16x32xf32>
    %99 = tpu.matmul %89, %90, %cst_33 {dimension_numbers = #tpu.dot_dimension_numbers<[1], [0], [0], [1], [0, 0, 1, 1], [], []>} : vector<16x32xf32>, vector<32x32xf32>, vector<16x32xf32> -> vector<16x32xf32>
    %100 = vector.broadcast %94 : vector<1x32xf32> to vector<16x32xf32>
    %101 = arith.addf %99, %100 : vector<16x32xf32>
    %cst_34 = arith.constant dense<0.000000e+00> : vector<16x32xf32>
    %102 = tpu.matmul %1, %91, %cst_34 {dimension_numbers = #tpu.dot_dimension_numbers<[1], [0], [0], [1], [0, 0, 1, 1], [], []>} : vector<16x32xf32>, vector<32x32xf32>, vector<16x32xf32> -> vector<16x32xf32>
    %103 = vector.broadcast %95 : vector<1x32xf32> to vector<16x32xf32>
    %104 = arith.addf %102, %103 : vector<16x32xf32>
    %cst_35 = arith.constant dense<0.000000e+00> : vector<16x32xf32>
    %105 = tpu.matmul %1, %92, %cst_35 {dimension_numbers = #tpu.dot_dimension_numbers<[1], [0], [0], [1], [0, 0, 1, 1], [], []>} : vector<16x32xf32>, vector<32x32xf32>, vector<16x32xf32> -> vector<16x32xf32>
    %106 = vector.broadcast %96 : vector<1x32xf32> to vector<16x32xf32>
    %107 = arith.addf %105, %106 : vector<16x32xf32>
    %108 = vector.extract_strided_slice %101 {offsets = [0, 0], sizes = [8, 16], strides = [1, 1]} : vector<16x32xf32> to vector<8x16xf32>
    %109 = vector.extract_strided_slice %104 {offsets = [0, 0], sizes = [8, 16], strides = [1, 1]} : vector<16x32xf32> to vector<8x16xf32>
    %110 = vector.extract_strided_slice %107 {offsets = [0, 0], sizes = [8, 16], strides = [1, 1]} : vector<16x32xf32> to vector<8x16xf32>
    "tpu.trace_start"() <{level = 10 : i32, message = "qd,kd->qk"}> : () -> ()
    %cst_36 = arith.constant dense<0.000000e+00> : vector<8x8xf32>
    %111 = tpu.matmul %108, %109, %cst_36 {dimension_numbers = #tpu.dot_dimension_numbers<[1], [1], [0], [0], [0, 0, 1, 0], [], []>} : vector<8x16xf32>, vector<8x16xf32>, vector<8x8xf32> -> vector<8x8xf32>
    "tpu.trace_stop"() : () -> ()
    %cst_37 = arith.constant dense<0xFF800000> : vector<8xf32>
    %112 = vector.multi_reduction <maximumf>, %111, %cst_37 [1] : vector<8x8xf32> to vector<8xf32>
    %113 = vector.shape_cast %112 : vector<8xf32> to vector<8x1xf32>
    %114 = vector.broadcast %113 : vector<8x1xf32> to vector<8x8xf32>
    %115 = arith.subf %111, %114 : vector<8x8xf32>
    %116 = math.exp %115 : vector<8x8xf32>
    %cst_38 = arith.constant dense<0.000000e+00> : vector<8xf32>
    %117 = vector.multi_reduction <add>, %116, %cst_38 [1] : vector<8x8xf32> to vector<8xf32>
    %118 = vector.shape_cast %117 : vector<8xf32> to vector<8x1xf32>
    %119 = tpu.reciprocal %118 {approx = true} : vector<8x1xf32> -> vector<8x1xf32>
    %120 = vector.broadcast %119 : vector<8x1xf32> to vector<8x8xf32>
    %121 = arith.mulf %116, %120 : vector<8x8xf32>
    %cst_39 = arith.constant dense<0.000000e+00> : vector<8x16xf32>
    %122 = tpu.matmul %121, %110, %cst_39 {dimension_numbers = #tpu.dot_dimension_numbers<[1], [0], [0], [1], [0, 0, 1, 1], [], []>} : vector<8x8xf32>, vector<8x16xf32>, vector<8x16xf32> -> vector<8x16xf32>
    %123 = vector.extract_strided_slice %101 {offsets = [0, 16], sizes = [8, 16], strides = [1, 1]} : vector<16x32xf32> to vector<8x16xf32>
    %124 = vector.extract_strided_slice %104 {offsets = [0, 16], sizes = [8, 16], strides = [1, 1]} : vector<16x32xf32> to vector<8x16xf32>
    %125 = vector.extract_strided_slice %107 {offsets = [0, 16], sizes = [8, 16], strides = [1, 1]} : vector<16x32xf32> to vector<8x16xf32>
    "tpu.trace_start"() <{level = 10 : i32, message = "qd,kd->qk"}> : () -> ()
    %cst_40 = arith.constant dense<0.000000e+00> : vector<8x8xf32>
    %126 = tpu.matmul %123, %124, %cst_40 {dimension_numbers = #tpu.dot_dimension_numbers<[1], [1], [0], [0], [0, 0, 1, 0], [], []>} : vector<8x16xf32>, vector<8x16xf32>, vector<8x8xf32> -> vector<8x8xf32>
    "tpu.trace_stop"() : () -> ()
    %cst_41 = arith.constant dense<0xFF800000> : vector<8xf32>
    %127 = vector.multi_reduction <maximumf>, %126, %cst_41 [1] : vector<8x8xf32> to vector<8xf32>
    %128 = vector.shape_cast %127 : vector<8xf32> to vector<8x1xf32>
    %129 = vector.broadcast %128 : vector<8x1xf32> to vector<8x8xf32>
    %130 = arith.subf %126, %129 : vector<8x8xf32>
    %131 = math.exp %130 : vector<8x8xf32>
    %cst_42 = arith.constant dense<0.000000e+00> : vector<8xf32>
    %132 = vector.multi_reduction <add>, %131, %cst_42 [1] : vector<8x8xf32> to vector<8xf32>
    %133 = vector.shape_cast %132 : vector<8xf32> to vector<8x1xf32>
    %134 = tpu.reciprocal %133 {approx = true} : vector<8x1xf32> -> vector<8x1xf32>
    %135 = vector.broadcast %134 : vector<8x1xf32> to vector<8x8xf32>
    %136 = arith.mulf %131, %135 : vector<8x8xf32>
    %cst_43 = arith.constant dense<0.000000e+00> : vector<8x16xf32>
    %137 = tpu.matmul %136, %125, %cst_43 {dimension_numbers = #tpu.dot_dimension_numbers<[1], [0], [0], [1], [0, 0, 1, 1], [], []>} : vector<8x8xf32>, vector<8x16xf32>, vector<8x16xf32> -> vector<8x16xf32>
    %138 = tpu.concatenate %122, %137 in 1 : vector<8x16xf32>, vector<8x16xf32> -> vector<8x32xf32>
    %139 = vector.extract_strided_slice %101 {offsets = [8, 0], sizes = [8, 16], strides = [1, 1]} : vector<16x32xf32> to vector<8x16xf32>
    %140 = vector.extract_strided_slice %104 {offsets = [8, 0], sizes = [8, 16], strides = [1, 1]} : vector<16x32xf32> to vector<8x16xf32>
    %141 = vector.extract_strided_slice %107 {offsets = [8, 0], sizes = [8, 16], strides = [1, 1]} : vector<16x32xf32> to vector<8x16xf32>
    "tpu.trace_start"() <{level = 10 : i32, message = "qd,kd->qk"}> : () -> ()
    %cst_44 = arith.constant dense<0.000000e+00> : vector<8x8xf32>
    %142 = tpu.matmul %139, %140, %cst_44 {dimension_numbers = #tpu.dot_dimension_numbers<[1], [1], [0], [0], [0, 0, 1, 0], [], []>} : vector<8x16xf32>, vector<8x16xf32>, vector<8x8xf32> -> vector<8x8xf32>
    "tpu.trace_stop"() : () -> ()
    %cst_45 = arith.constant dense<0xFF800000> : vector<8xf32>
    %143 = vector.multi_reduction <maximumf>, %142, %cst_45 [1] : vector<8x8xf32> to vector<8xf32>
    %144 = vector.shape_cast %143 : vector<8xf32> to vector<8x1xf32>
    %145 = vector.broadcast %144 : vector<8x1xf32> to vector<8x8xf32>
    %146 = arith.subf %142, %145 : vector<8x8xf32>
    %147 = math.exp %146 : vector<8x8xf32>
    %cst_46 = arith.constant dense<0.000000e+00> : vector<8xf32>
    %148 = vector.multi_reduction <add>, %147, %cst_46 [1] : vector<8x8xf32> to vector<8xf32>
    %149 = vector.shape_cast %148 : vector<8xf32> to vector<8x1xf32>
    %150 = tpu.reciprocal %149 {approx = true} : vector<8x1xf32> -> vector<8x1xf32>
    %151 = vector.broadcast %150 : vector<8x1xf32> to vector<8x8xf32>
    %152 = arith.mulf %147, %151 : vector<8x8xf32>
    %cst_47 = arith.constant dense<0.000000e+00> : vector<8x16xf32>
    %153 = tpu.matmul %152, %141, %cst_47 {dimension_numbers = #tpu.dot_dimension_numbers<[1], [0], [0], [1], [0, 0, 1, 1], [], []>} : vector<8x8xf32>, vector<8x16xf32>, vector<8x16xf32> -> vector<8x16xf32>
    %154 = vector.extract_strided_slice %101 {offsets = [8, 16], sizes = [8, 16], strides = [1, 1]} : vector<16x32xf32> to vector<8x16xf32>
    %155 = vector.extract_strided_slice %104 {offsets = [8, 16], sizes = [8, 16], strides = [1, 1]} : vector<16x32xf32> to vector<8x16xf32>
    %156 = vector.extract_strided_slice %107 {offsets = [8, 16], sizes = [8, 16], strides = [1, 1]} : vector<16x32xf32> to vector<8x16xf32>
    "tpu.trace_start"() <{level = 10 : i32, message = "qd,kd->qk"}> : () -> ()
    %cst_48 = arith.constant dense<0.000000e+00> : vector<8x8xf32>
    %157 = tpu.matmul %154, %155, %cst_48 {dimension_numbers = #tpu.dot_dimension_numbers<[1], [1], [0], [0], [0, 0, 1, 0], [], []>} : vector<8x16xf32>, vector<8x16xf32>, vector<8x8xf32> -> vector<8x8xf32>
    "tpu.trace_stop"() : () -> ()
    %cst_49 = arith.constant dense<0xFF800000> : vector<8xf32>
    %158 = vector.multi_reduction <maximumf>, %157, %cst_49 [1] : vector<8x8xf32> to vector<8xf32>
    %159 = vector.shape_cast %158 : vector<8xf32> to vector<8x1xf32>
    %160 = vector.broadcast %159 : vector<8x1xf32> to vector<8x8xf32>
    %161 = arith.subf %157, %160 : vector<8x8xf32>
    %162 = math.exp %161 : vector<8x8xf32>
    %cst_50 = arith.constant dense<0.000000e+00> : vector<8xf32>
    %163 = vector.multi_reduction <add>, %162, %cst_50 [1] : vector<8x8xf32> to vector<8xf32>
    %164 = vector.shape_cast %163 : vector<8xf32> to vector<8x1xf32>
    %165 = tpu.reciprocal %164 {approx = true} : vector<8x1xf32> -> vector<8x1xf32>
    %166 = vector.broadcast %165 : vector<8x1xf32> to vector<8x8xf32>
    %167 = arith.mulf %162, %166 : vector<8x8xf32>
    %cst_51 = arith.constant dense<0.000000e+00> : vector<8x16xf32>
    %168 = tpu.matmul %167, %156, %cst_51 {dimension_numbers = #tpu.dot_dimension_numbers<[1], [0], [0], [1], [0, 0, 1, 1], [], []>} : vector<8x8xf32>, vector<8x16xf32>, vector<8x16xf32> -> vector<8x16xf32>
    %169 = tpu.concatenate %153, %168 in 1 : vector<8x16xf32>, vector<8x16xf32> -> vector<8x32xf32>
    %170 = tpu.concatenate %138, %169 in 0 : vector<8x32xf32>, vector<8x32xf32> -> vector<16x32xf32>
    %cst_52 = arith.constant dense<0.000000e+00> : vector<16x32xf32>
    %171 = tpu.matmul %170, %93, %cst_52 {dimension_numbers = #tpu.dot_dimension_numbers<[1], [0], [0], [1], [0, 0, 1, 1], [], []>} : vector<16x32xf32>, vector<32x32xf32>, vector<16x32xf32> -> vector<16x32xf32>
    %172 = vector.broadcast %97 : vector<1x32xf32> to vector<16x32xf32>
    %173 = arith.addf %171, %172 : vector<16x32xf32>
    %174 = vector.broadcast %98 : f32 to vector<16x32xf32>
    %175 = arith.mulf %174, %89 : vector<16x32xf32>
    %176 = arith.addf %175, %173 : vector<16x32xf32>
    %c256 = arith.constant 256 : index
    %c0_53 = arith.constant 0 : index
    %177 = vector.load %arg3[%c256, %c0_53] : memref<336x32xf32, #tpu.memory_space<vmem>>, vector<32x32xf32>
    %cst_54 = arith.constant dense<0.000000e+00> : vector<16x32xf32>
    %178 = tpu.matmul %176, %177, %cst_54 {dimension_numbers = #tpu.dot_dimension_numbers<[1], [0], [0], [1], [0, 0, 1, 1], [], []>} : vector<16x32xf32>, vector<32x32xf32>, vector<16x32xf32> -> vector<16x32xf32>
    %179 = vector.extract_strided_slice %2 {offsets = [8, 0], sizes = [1, 32], strides = [1, 1]} : vector<16x32xf32> to vector<1x32xf32>
    %180 = vector.broadcast %179 : vector<1x32xf32> to vector<16x32xf32>
    %181 = arith.addf %178, %180 : vector<16x32xf32>
    %cst_55 = arith.constant 0.000000e+00 : f32
    %182 = vector.broadcast %cst_55 : f32 to vector<16x32xf32>
    %183 = arith.maximumf %181, %182 : vector<16x32xf32>
    %c288 = arith.constant 288 : index
    %c0_56 = arith.constant 0 : index
    %184 = vector.load %arg3[%c288, %c0_56] : memref<336x32xf32, #tpu.memory_space<vmem>>, vector<32x32xf32>
    %cst_57 = arith.constant dense<0.000000e+00> : vector<16x32xf32>
    %185 = tpu.matmul %183, %184, %cst_57 {dimension_numbers = #tpu.dot_dimension_numbers<[1], [0], [0], [1], [0, 0, 1, 1], [], []>} : vector<16x32xf32>, vector<32x32xf32>, vector<16x32xf32> -> vector<16x32xf32>
    %186 = vector.extract_strided_slice %2 {offsets = [9, 0], sizes = [1, 32], strides = [1, 1]} : vector<16x32xf32> to vector<1x32xf32>
    %187 = vector.broadcast %186 : vector<1x32xf32> to vector<16x32xf32>
    %188 = arith.addf %185, %187 : vector<16x32xf32>
    %189 = arith.addf %0, %1 : vector<16x32xf32>
    %cst_58 = arith.constant 5.000000e-01 : f32
    %190 = vector.broadcast %cst_58 : f32 to vector<16x32xf32>
    %191 = arith.mulf %190, %189 : vector<16x32xf32>
    %192 = arith.addf %188, %191 : vector<16x32xf32>
    %c0_59 = arith.constant 0 : index
    %c0_60 = arith.constant 0 : index
    %193 = vector.load %arg4[%c0_59, %c0_60] : memref<16x32xf32, #tpu.memory_space<vmem>>, vector<16x32xf32>
    tpu.vector_store %arg4[%c0_59, %c0_60], %192 {strides = array<i32>} : memref<16x32xf32, #tpu.memory_space<vmem>>, vector<16x32xf32>,
    return
  }
}

</mosaic_0001>

<llo_original>
// kernel: tpu_custom_call.1
$region0: #{tpu_custom_call.1}
  #allocation0 [shape = 'u32[]', space=smem, size = 0x4, offset = 0x4, fixed_abs, tag = 'smem constant byte address 0x4 - core index']
  #allocation1 [shape = 'u32[72,128]{1,0:T(1,128)}', space=vmem, size = 0x9000, scoped, tag = 'internal scratch']
  %s0 = inlined_call_operand.vmem [shape: f32[2], index: 0, kind: input, shape index: {}]
  %s1 = inlined_call_operand.vmem [shape: f32[16,32], index: 1, kind: input, shape index: {}]
  %s2 = inlined_call_operand.vmem [shape: f32[16,32], index: 2, kind: input, shape index: {}]
  %s3 = inlined_call_operand.vmem [shape: f32[336,32], index: 3, kind: input, shape index: {}]
  %s4 = inlined_call_operand.hbm [shape: f32[16,32], index: 4, kind: output, shape index: {}]
  %s5 = sld [smem:[#allocation0]]
  $region30: #{tpu_custom_call.1} parent=0
    _
  %s7 = ssub.s32 1, %s5
  %s8 = scalar_select 0, %s7, %s5
  $region1: #{tpu_custom_call.1} parent=0
    #allocation2 [shape = 'u8[512]{0}', space=smem, size = 0x200, scoped, tag = 'input window, operand 0, single buffered']
    #allocation3 [shape = 's32[1]{0}', space=sflag, size = 0x4, scoped, tag = 'scoped memory for tpu_custom_call.1']
    #allocation4 [shape = 's32[1]{0}', space=sflag, size = 0x4, scoped, tag = 'scoped memory for tpu_custom_call.1']
    #allocation5 [shape = 'u8[8192]{0}', space=vmem, size = 0x2000, scoped, tag = 'output window, operand 0, single buffered']
    %9 = vsyncpa [#allocation4], 0
    %10 = vsyncpa [#allocation3], 0
    // Predicated region
    $region2: #{tpu_custom_call.1} parent=1 // pred_check
      _
    $region3: #{tpu_custom_call.1} parent=1 // pred_check_branch
      %12 = sbr.rel (0) target = $region5
    $region4: #{tpu_custom_call.1} parent=1 // pred_region
      %14 = vsyncadd [#allocation4], 0
      %s16 = sshll.u32 %s0, 4
      %s17 = int_to_ptr.vmem [resolvable:$true] %s16
      %19 = dma.vmem_to_smem %s17, 16, [#allocation2], [#allocation4]
    $region5: #{tpu_custom_call.1} parent=1 // pred_fallthru
      _
    // Predicated region
    $region6: #{tpu_custom_call.1} parent=1 // pred_check
      _
    $region7: #{tpu_custom_call.1} parent=1 // pred_check_branch
      %21 = sbr.rel (0) target = $region9
    $region8: #{tpu_custom_call.1} parent=1 // pred_region
      _
    $region9: #{tpu_custom_call.1} parent=1 // pred_fallthru
      _
    // Predicated region
    $region10: #{tpu_custom_call.1} parent=1 // pred_check
      _
    $region11: #{tpu_custom_call.1} parent=1 // pred_check_branch
      %23 = sbr.rel (0) target = $region13
    $region12: #{tpu_custom_call.1} parent=1 // pred_region
      _
    $region13: #{tpu_custom_call.1} parent=1 // pred_fallthru
      _
    // Predicated region
    $region14: #{tpu_custom_call.1} parent=1 // pred_check
      _
    $region15: #{tpu_custom_call.1} parent=1 // pred_check_branch
      %25 = sbr.rel (0) target = $region17
    $region16: #{tpu_custom_call.1} parent=1 // pred_region
      _
    $region17: #{tpu_custom_call.1} parent=1 // pred_fallthru
      _
    // Predicated region
    $region18: #{tpu_custom_call.1} parent=1 // pred_check
      _
    $region19: #{tpu_custom_call.1} parent=1 // pred_check_branch
      %27 = sbr.rel (0) target = $region21
    $region20: #{tpu_custom_call.1} parent=1 // pred_region
      %29 = dma.done [#allocation4], 16
    $region21: #{tpu_custom_call.1} parent=1 // pred_fallthru
      _
    %30 = sfence
    %v31 = vld [vmem:[%s1] sm:$0xff]
    %v32 = vld [vmem:[%s1 + $0x8] sm:$0xff]
    %v33 = vld [vmem:[%s2] sm:$0xff]
    %v34 = vld [vmem:[%s2 + $0x8] sm:$0xff]
    %v35 = vld [vmem:[%s3 + $0x140] sm:$0xff]
    %v36 = vld [vmem:[%s3 + $0x148] sm:$0xff]
    %v37 = vld [vmem:[%s3] sm:$0xff]
    %v38 = vld [vmem:[%s3 + $0x8] sm:$0xff]
    %v39 = vld [vmem:[%s3 + $0x10] sm:$0xff]
    %v40 = vld [vmem:[%s3 + $0x18] sm:$0xff]
    %v41 = vld [vmem:[%s3 + $0x20] sm:$0xff]
    %v42 = vld [vmem:[%s3 + $0x28] sm:$0xff]
    %v43 = vld [vmem:[%s3 + $0x30] sm:$0xff]
    %v44 = vld [vmem:[%s3 + $0x38] sm:$0xff]
    %v45 = vld [vmem:[%s3 + $0x40] sm:$0xff]
    %v46 = vld [vmem:[%s3 + $0x48] sm:$0xff]
    %v47 = vld [vmem:[%s3 + $0x50] sm:$0xff]
    %v48 = vld [vmem:[%s3 + $0x58] sm:$0xff]
    %v49 = vld [vmem:[%s3 + $0x60] sm:$0xff]
    %v50 = vld [vmem:[%s3 + $0x68] sm:$0xff]
    %v51 = vld [vmem:[%s3 + $0x70] sm:$0xff]
    %v52 = vld [vmem:[%s3 + $0x78] sm:$0xff]
    %s53 = sld [smem:[#allocation2]]
    %v54 = vperm.slane %v35, 0
    %vm55 = vcmask 261120
    %v57 = vsel %vm55, %v31, 0
    %v60 = vsel %vm55, %v32, 0
    %62 = vmatpush.msra.mxu0 0.0
    %63 = vmatpush.msra.mxu0 0.0
    %64 = vmatpush.msra.mxu0 0.0
    %65 = vmatpush.msra.mxu0 0.0
    %66 = vmatpush.msra.mxu0 0.0
    %67 = vmatpush.msra.mxu0 0.0
    %68 = vmatpush.msra.mxu0 0.0
    %69 = vmatpush.msra.mxu0 0.0
    %70 = vmatpush.msra.mxu0 0.0
    %71 = vmatpush.msra.mxu0 0.0
    %72 = vmatpush.msra.mxu0 0.0
    %73 = vmatpush.msra.mxu0 0.0
    %74 = vmatpush.msra.mxu0 %v40
    %75 = vmatpush.msra.mxu0 %v39
    %76 = vmatpush.msra.mxu0 %v38
    %77 = vmatpush.msra.mxu0 %v37
    %78 = vmatmul.f32.gmra.mxu0 %v57
    %v79 = vpop.f32.mrf.mxu0
    %v80 = vadd.f32 %v54, %v79
    %81 = vmatmul.f32.gmra.mxu0 %v60
    %v82 = vpop.f32.mrf.mxu0
    %v83 = vadd.f32 %v54, %v82
    %84 = vdwg.mxu0
    %v85 = vperm.slane %v35, 1
    %v87 = vsel %vm55, %v33, 0
    %v90 = vsel %vm55, %v34, 0
    %92 = vmatpush.msra.mxu0 0.0
    %93 = vmatpush.msra.mxu0 0.0
    %94 = vmatpush.msra.mxu0 0.0
    %95 = vmatpush.msra.mxu0 0.0
    %96 = vmatpush.msra.mxu0 0.0
    %97 = vmatpush.msra.mxu0 0.0
    %98 = vmatpush.msra.mxu0 0.0
    %99 = vmatpush.msra.mxu0 0.0
    %100 = vmatpush.msra.mxu0 0.0
    %101 = vmatpush.msra.mxu0 0.0
    %102 = vmatpush.msra.mxu0 0.0
    %103 = vmatpush.msra.mxu0 0.0
    %104 = vmatpush.msra.mxu0 %v44
    %105 = vmatpush.msra.mxu0 %v43
    %106 = vmatpush.msra.mxu0 %v42
    %107 = vmatpush.msra.mxu0 %v41
    %108 = vmatmul.f32.gmra.mxu0 %v87
    %v109 = vpop.f32.mrf.mxu0
    %v110 = vadd.f32 %v85, %v109
    %111 = vmatmul.f32.gmra.mxu0 %v90
    %v112 = vpop.f32.mrf.mxu0
    %v113 = vadd.f32 %v85, %v112
    %114 = vdwg.mxu0
    %v115 = vperm.slane %v35, 2
    %116 = vmatpush.msra.mxu0 0.0
    %117 = vmatpush.msra.mxu0 0.0
    %118 = vmatpush.msra.mxu0 0.0
    %119 = vmatpush.msra.mxu0 0.0
    %120 = vmatpush.msra.mxu0 0.0
    %121 = vmatpush.msra.mxu0 0.0
    %122 = vmatpush.msra.mxu0 0.0
    %123 = vmatpush.msra.mxu0 0.0
    %124 = vmatpush.msra.mxu0 0.0
    %125 = vmatpush.msra.mxu0 0.0
    %126 = vmatpush.msra.mxu0 0.0
    %127 = vmatpush.msra.mxu0 0.0
    %128 = vmatpush.msra.mxu0 %v48
    %129 = vmatpush.msra.mxu0 %v47
    %130 = vmatpush.msra.mxu0 %v46
    %131 = vmatpush.msra.mxu0 %v45
    %132 = vmatmul.f32.gmra.mxu0 %v87
    %v133 = vpop.f32.mrf.mxu0
    %v134 = vadd.f32 %v115, %v133
    %135 = vmatmul.f32.gmra.mxu0 %v90
    %v136 = vpop.f32.mrf.mxu0
    %v137 = vadd.f32 %v115, %v136
    %138 = vdwg.mxu0
    %vm139 = vcmask 130048
    %v141 = vsel %vm139, %v80, 0
    %v144 = vsel %vm139, %v110, 0
    %146 = vmatpush.xpose.msra.mxu0 0.0
    %147 = vmatpush.xpose.msra.mxu0 0.0
    %148 = vmatpush.xpose.msra.mxu0 0.0
    %149 = vmatpush.xpose.msra.mxu0 0.0
    %150 = vmatpush.xpose.msra.mxu0 0.0
    %151 = vmatpush.xpose.msra.mxu0 0.0
    %152 = vmatpush.xpose.msra.mxu0 0.0
    %153 = vmatpush.xpose.msra.mxu0 0.0
    %154 = vmatpush.xpose.msra.mxu0 0.0
    %155 = vmatpush.xpose.msra.mxu0 0.0
    %156 = vmatpush.xpose.msra.mxu0 0.0
    %157 = vmatpush.xpose.msra.mxu0 0.0
    %158 = vmatpush.xpose.msra.mxu0 0.0
    %159 = vmatpush.xpose.msra.mxu0 0.0
    %160 = vmatpush.xpose.msra.mxu0 0.0
    %161 = vmatpush.xpose.msra.mxu0 %v144
    %162 = vmatmul.f32.gmra.mxu0 %v141
    %v163 = vpop.f32.mrf.mxu0
    %v164 = vadd.f32 0.0, %v163
    %165 = vdwg.mxu0
    %vm166 = vcmask 64512
    %v167 = vsel %vm166, %v164, -inf
    %168 = vmax.xlane.f32.xlu0 %v167
    %v169 = vpop.xlane.xlu0 %168
    %v170 = vsub.f32 %v164, %v169
    %v171 = vmul.f32 %v170, 1.442695
    %v172 = vpow.pop %v171
    %v173 = vsel %vm166, %v172, 0.0
    %174 = vadd.xlane.f32.xlu0 %v173
    %v175 = vpop.xlane.xlu0 %174
    %v176 = vrcp.pop %v175
    %v177 = vmul.f32 %v172, %v176
    %v179 = vsel %vm166, %v177, 0
    %181 = vmatpush.msra.mxu0 0.0
    %182 = vmatpush.msra.mxu0 0.0
    %183 = vmatpush.msra.mxu0 0.0
    %184 = vmatpush.msra.mxu0 0.0
    %185 = vmatpush.msra.mxu0 0.0
    %186 = vmatpush.msra.mxu0 0.0
    %187 = vmatpush.msra.mxu0 0.0
    %188 = vmatpush.msra.mxu0 0.0
    %189 = vmatpush.msra.mxu0 0.0
    %190 = vmatpush.msra.mxu0 0.0
    %191 = vmatpush.msra.mxu0 0.0
    %192 = vmatpush.msra.mxu0 0.0
    %193 = vmatpush.msra.mxu0 0.0
    %194 = vmatpush.msra.mxu0 0.0
    %195 = vmatpush.msra.mxu0 0.0
    %196 = vmatpush.msra.mxu0 %v134
    %197 = vmatmul.f32.gmra.mxu0 %v179
    %v198 = vpop.f32.mrf.mxu0
    %v199 = vadd.f32 0.0, %v198
    %200 = vdwg.mxu0
    %201 = vrot.lane.b32.xlu0 %v80, 112
    %v202 = vpop.permute.xlu0 %201
    %203 = vrot.lane.b32.xlu0 %v110, 112
    %v204 = vpop.permute.xlu0 %203
    %v205 = vsel %vm139, %v202, 0
    %v207 = vsel %vm139, %v204, 0
    %209 = vmatpush.xpose.msra.mxu0 0.0
    %210 = vmatpush.xpose.msra.mxu0 0.0
    %211 = vmatpush.xpose.msra.mxu0 0.0
    %212 = vmatpush.xpose.msra.mxu0 0.0
    %213 = vmatpush.xpose.msra.mxu0 0.0
    %214 = vmatpush.xpose.msra.mxu0 0.0
    %215 = vmatpush.xpose.msra.mxu0 0.0
    %216 = vmatpush.xpose.msra.mxu0 0.0
    %217 = vmatpush.xpose.msra.mxu0 0.0
    %218 = vmatpush.xpose.msra.mxu0 0.0
    %219 = vmatpush.xpose.msra.mxu0 0.0
    %220 = vmatpush.xpose.msra.mxu0 0.0
    %221 = vmatpush.xpose.msra.mxu0 0.0
    %222 = vmatpush.xpose.msra.mxu0 0.0
    %223 = vmatpush.xpose.msra.mxu0 0.0
    %224 = vmatpush.xpose.msra.mxu0 %v207
    %225 = vmatmul.f32.gmra.mxu0 %v205
    %v226 = vpop.f32.mrf.mxu0
    %v227 = vadd.f32 0.0, %v226
    %228 = vdwg.mxu0
    %v229 = vsel %vm166, %v227, -inf
    %230 = vmax.xlane.f32.xlu0 %v229
    %v231 = vpop.xlane.xlu0 %230
    %v232 = vsub.f32 %v227, %v231
    %v233 = vmul.f32 %v232, 1.442695
    %v234 = vpow.pop %v233
    %v235 = vsel %vm166, %v234, 0.0
    %236 = vadd.xlane.f32.xlu0 %v235
    %v237 = vpop.xlane.xlu0 %236
    %v238 = vrcp.pop %v237
    %v239 = vmul.f32 %v234, %v238
    %241 = vrot.lane.b32.xlu0 %v134, 112
    %v242 = vpop.permute.xlu0 %241
    %v245 = vsel %vm166, %v239, 0
    %247 = vmatpush.msra.mxu0 0.0
    %248 = vmatpush.msra.mxu0 0.0
    %249 = vmatpush.msra.mxu0 0.0
    %250 = vmatpush.msra.mxu0 0.0
    %251 = vmatpush.msra.mxu0 0.0
    %252 = vmatpush.msra.mxu0 0.0
    %253 = vmatpush.msra.mxu0 0.0
    %254 = vmatpush.msra.mxu0 0.0
    %255 = vmatpush.msra.mxu0 0.0
    %256 = vmatpush.msra.mxu0 0.0
    %257 = vmatpush.msra.mxu0 0.0
    %258 = vmatpush.msra.mxu0 0.0
    %259 = vmatpush.msra.mxu0 0.0
    %260 = vmatpush.msra.mxu0 0.0
    %261 = vmatpush.msra.mxu0 0.0
    %262 = vmatpush.msra.mxu0 %v242
    %263 = vmatmul.f32.gmra.mxu0 %v245
    %v264 = vpop.f32.mrf.mxu0
    %v265 = vadd.f32 0.0, %v264
    %266 = vdwg.mxu0
    %268 = vrot.lane.b32.xlu0 %v265, 16
    %v269 = vpop.permute.xlu0 %268
    %v271 = vsel %vm139, %v199, %v269
    %v273 = vsel %vm139, %v83, 0
    %v276 = vsel %vm139, %v113, 0
    %278 = vmatpush.xpose.msra.mxu0 0.0
    %279 = vmatpush.xpose.msra.mxu0 0.0
    %280 = vmatpush.xpose.msra.mxu0 0.0
    %281 = vmatpush.xpose.msra.mxu0 0.0
    %282 = vmatpush.xpose.msra.mxu0 0.0
    %283 = vmatpush.xpose.msra.mxu0 0.0
    %284 = vmatpush.xpose.msra.mxu0 0.0
    %285 = vmatpush.xpose.msra.mxu0 0.0
    %286 = vmatpush.xpose.msra.mxu0 0.0
    %287 = vmatpush.xpose.msra.mxu0 0.0
    %288 = vmatpush.xpose.msra.mxu0 0.0
    %289 = vmatpush.xpose.msra.mxu0 0.0
    %290 = vmatpush.xpose.msra.mxu0 0.0
    %291 = vmatpush.xpose.msra.mxu0 0.0
    %292 = vmatpush.xpose.msra.mxu0 0.0
    %293 = vmatpush.xpose.msra.mxu0 %v276
    %294 = vmatmul.f32.gmra.mxu0 %v273
    %v295 = vpop.f32.mrf.mxu0
    %v296 = vadd.f32 0.0, %v295
    %297 = vdwg.mxu0
    %v298 = vsel %vm166, %v296, -inf
    %299 = vmax.xlane.f32.xlu0 %v298
    %v300 = vpop.xlane.xlu0 %299
    %v301 = vsub.f32 %v296, %v300
    %v302 = vmul.f32 %v301, 1.442695
    %v303 = vpow.pop %v302
    %v304 = vsel %vm166, %v303, 0.0
    %305 = vadd.xlane.f32.xlu0 %v304
    %v306 = vpop.xlane.xlu0 %305
    %v307 = vrcp.pop %v306
    %v308 = vmul.f32 %v303, %v307
    %v310 = vsel %vm166, %v308, 0
    %312 = vmatpush.msra.mxu0 0.0
    %313 = vmatpush.msra.mxu0 0.0
    %314 = vmatpush.msra.mxu0 0.0
    %315 = vmatpush.msra.mxu0 0.0
    %316 = vmatpush.msra.mxu0 0.0
    %317 = vmatpush.msra.mxu0 0.0
    %318 = vmatpush.msra.mxu0 0.0
    %319 = vmatpush.msra.mxu0 0.0
    %320 = vmatpush.msra.mxu0 0.0
    %321 = vmatpush.msra.mxu0 0.0
    %322 = vmatpush.msra.mxu0 0.0
    %323 = vmatpush.msra.mxu0 0.0
    %324 = vmatpush.msra.mxu0 0.0
    %325 = vmatpush.msra.mxu0 0.0
    %326 = vmatpush.msra.mxu0 0.0
    %327 = vmatpush.msra.mxu0 %v137
    %328 = vmatmul.f32.gmra.mxu0 %v310
    %v329 = vpop.f32.mrf.mxu0
    %v330 = vadd.f32 0.0, %v329
    %331 = vdwg.mxu0
    %332 = vrot.lane.b32.xlu0 %v83, 112
    %v333 = vpop.permute.xlu0 %332
    %334 = vrot.lane.b32.xlu0 %v113, 112
    %v335 = vpop.permute.xlu0 %334
    %v336 = vsel %vm139, %v333, 0
    %v338 = vsel %vm139, %v335, 0
    %340 = vmatpush.xpose.msra.mxu0 0.0
    %341 = vmatpush.xpose.msra.mxu0 0.0
    %342 = vmatpush.xpose.msra.mxu0 0.0
    %343 = vmatpush.xpose.msra.mxu0 0.0
    %344 = vmatpush.xpose.msra.mxu0 0.0
    %345 = vmatpush.xpose.msra.mxu0 0.0
    %346 = vmatpush.xpose.msra.mxu0 0.0
    %347 = vmatpush.xpose.msra.mxu0 0.0
    %348 = vmatpush.xpose.msra.mxu0 0.0
    %349 = vmatpush.xpose.msra.mxu0 0.0
    %350 = vmatpush.xpose.msra.mxu0 0.0
    %351 = vmatpush.xpose.msra.mxu0 0.0
    %352 = vmatpush.xpose.msra.mxu0 0.0
    %353 = vmatpush.xpose.msra.mxu0 0.0
    %354 = vmatpush.xpose.msra.mxu0 0.0
    %355 = vmatpush.xpose.msra.mxu0 %v338
    %356 = vmatmul.f32.gmra.mxu0 %v336
    %v357 = vpop.f32.mrf.mxu0
    %v358 = vadd.f32 0.0, %v357
    %359 = vdwg.mxu0
    %v360 = vsel %vm166, %v358, -inf
    %361 = vmax.xlane.f32.xlu0 %v360
    %v362 = vpop.xlane.xlu0 %361
    %v363 = vsub.f32 %v358, %v362
    %v364 = vmul.f32 %v363, 1.442695
    %v365 = vpow.pop %v364
    %v366 = vsel %vm166, %v365, 0.0
    %367 = vadd.xlane.f32.xlu0 %v366
    %v368 = vpop.xlane.xlu0 %367
    %v369 = vrcp.pop %v368
    %v370 = vmul.f32 %v365, %v369
    %372 = vrot.lane.b32.xlu0 %v137, 112
    %v373 = vpop.permute.xlu0 %372
    %v376 = vsel %vm166, %v370, 0
    %378 = vmatpush.msra.mxu0 0.0
    %379 = vmatpush.msra.mxu0 0.0
    %380 = vmatpush.msra.mxu0 0.0
    %381 = vmatpush.msra.mxu0 0.0
    %382 = vmatpush.msra.mxu0 0.0
    %383 = vmatpush.msra.mxu0 0.0
    %384 = vmatpush.msra.mxu0 0.0
    %385 = vmatpush.msra.mxu0 0.0
    %386 = vmatpush.msra.mxu0 0.0
    %387 = vmatpush.msra.mxu0 0.0
    %388 = vmatpush.msra.mxu0 0.0
    %389 = vmatpush.msra.mxu0 0.0
    %390 = vmatpush.msra.mxu0 0.0
    %391 = vmatpush.msra.mxu0 0.0
    %392 = vmatpush.msra.mxu0 0.0
    %393 = vmatpush.msra.mxu0 %v373
    %394 = vmatmul.f32.gmra.mxu0 %v376
    %v395 = vpop.f32.mrf.mxu0
    %v396 = vadd.f32 0.0, %v395
    %397 = vdwg.mxu0
    %399 = vrot.lane.b32.xlu0 %v396, 16
    %v400 = vpop.permute.xlu0 %399
    %v402 = vsel %vm139, %v330, %v400
    %v403 = vperm.slane %v35, 3
    %v405 = vsel %vm55, %v271, 0
    %v408 = vsel %vm55, %v402, 0
    %410 = vmatpush.msra.mxu0 0.0
    %411 = vmatpush.msra.mxu0 0.0
    %412 = vmatpush.msra.mxu0 0.0
    %413 = vmatpush.msra.mxu0 0.0
    %414 = vmatpush.msra.mxu0 0.0
    %415 = vmatpush.msra.mxu0 0.0
    %416 = vmatpush.msra.mxu0 0.0
    %417 = vmatpush.msra.mxu0 0.0
    %418 = vmatpush.msra.mxu0 0.0
    %419 = vmatpush.msra.mxu0 0.0
    %420 = vmatpush.msra.mxu0 0.0
    %421 = vmatpush.msra.mxu0 0.0
    %422 = vmatpush.msra.mxu0 %v52
    %423 = vmatpush.msra.mxu0 %v51
    %424 = vmatpush.msra.mxu0 %v50
    %425 = vmatpush.msra.mxu0 %v49
    %426 = vmatmul.f32.gmra.mxu0 %v405
    %v427 = vpop.f32.mrf.mxu0
    %v428 = vadd.f32 %v403, %v427
    %429 = vmatmul.f32.gmra.mxu0 %v408
    %v430 = vpop.f32.mrf.mxu0
    %v431 = vadd.f32 %v403, %v430
    %432 = vdwg.mxu0
    %v433 = vstv %s53
    %v434 = vmul.f32 %v433, %v31
    %v435 = vmul.f32 %v433, %v32
    %v436 = vadd.f32 %v434, %v428
    %v437 = vadd.f32 %v435, %v431
    %v438 = vld [vmem:[%s3 + $0x80] sm:$0xff]
    %v439 = vld [vmem:[%s3 + $0x88] sm:$0xff]
    %v440 = vld [vmem:[%s3 + $0x90] sm:$0xff]
    %v441 = vld [vmem:[%s3 + $0x98] sm:$0xff]
    %v442 = vld [vmem:[%s3 + $0xa0] sm:$0xff]
    %v443 = vld [vmem:[%s3 + $0xa8] sm:$0xff]
    %v444 = vld [vmem:[%s3 + $0xb0] sm:$0xff]
    %v445 = vld [vmem:[%s3 + $0xb8] sm:$0xff]
    %v446 = vld [vmem:[%s3 + $0xc0] sm:$0xff]
    %v447 = vld [vmem:[%s3 + $0xc8] sm:$0xff]
    %v448 = vld [vmem:[%s3 + $0xd0] sm:$0xff]
    %v449 = vld [vmem:[%s3 + $0xd8] sm:$0xff]
    %v450 = vld [vmem:[%s3 + $0xe0] sm:$0xff]
    %v451 = vld [vmem:[%s3 + $0xe8] sm:$0xff]
    %v452 = vld [vmem:[%s3 + $0xf0] sm:$0xff]
    %v453 = vld [vmem:[%s3 + $0xf8] sm:$0xff]
    %s454 = sld [smem:[#allocation2 + $0x1]]
    %v455 = vperm.slane %v35, 4
    %v457 = vsel %vm55, %v436, 0
    %v460 = vsel %vm55, %v437, 0
    %462 = vmatpush.msra.mxu0 0.0
    %463 = vmatpush.msra.mxu0 0.0
    %464 = vmatpush.msra.mxu0 0.0
    %465 = vmatpush.msra.mxu0 0.0
    %466 = vmatpush.msra.mxu0 0.0
    %467 = vmatpush.msra.mxu0 0.0
    %468 = vmatpush.msra.mxu0 0.0
    %469 = vmatpush.msra.mxu0 0.0
    %470 = vmatpush.msra.mxu0 0.0
    %471 = vmatpush.msra.mxu0 0.0
    %472 = vmatpush.msra.mxu0 0.0
    %473 = vmatpush.msra.mxu0 0.0
    %474 = vmatpush.msra.mxu0 %v441
    %475 = vmatpush.msra.mxu0 %v440
    %476 = vmatpush.msra.mxu0 %v439
    %477 = vmatpush.msra.mxu0 %v438
    %478 = vmatmul.f32.gmra.mxu0 %v457
    %v479 = vpop.f32.mrf.mxu0
    %v480 = vadd.f32 %v455, %v479
    %481 = vmatmul.f32.gmra.mxu0 %v460
    %v482 = vpop.f32.mrf.mxu0
    %v483 = vadd.f32 %v455, %v482
    %484 = vdwg.mxu0
    %v485 = vperm.slane %v35, 5
    %486 = vmatpush.msra.mxu0 0.0
    %487 = vmatpush.msra.mxu0 0.0
    %488 = vmatpush.msra.mxu0 0.0
    %489 = vmatpush.msra.mxu0 0.0
    %490 = vmatpush.msra.mxu0 0.0
    %491 = vmatpush.msra.mxu0 0.0
    %492 = vmatpush.msra.mxu0 0.0
    %493 = vmatpush.msra.mxu0 0.0
    %494 = vmatpush.msra.mxu0 0.0
    %495 = vmatpush.msra.mxu0 0.0
    %496 = vmatpush.msra.mxu0 0.0
    %497 = vmatpush.msra.mxu0 0.0
    %498 = vmatpush.msra.mxu0 %v445
    %499 = vmatpush.msra.mxu0 %v444
    %500 = vmatpush.msra.mxu0 %v443
    %501 = vmatpush.msra.mxu0 %v442
    %502 = vmatmul.f32.gmra.mxu0 %v87
    %v503 = vpop.f32.mrf.mxu0
    %v504 = vadd.f32 %v485, %v503
    %505 = vmatmul.f32.gmra.mxu0 %v90
    %v506 = vpop.f32.mrf.mxu0
    %v507 = vadd.f32 %v485, %v506
    %508 = vdwg.mxu0
    %v509 = vperm.slane %v35, 6
    %510 = vmatpush.msra.mxu0 0.0
    %511 = vmatpush.msra.mxu0 0.0
    %512 = vmatpush.msra.mxu0 0.0
    %513 = vmatpush.msra.mxu0 0.0
    %514 = vmatpush.msra.mxu0 0.0
    %515 = vmatpush.msra.mxu0 0.0
    %516 = vmatpush.msra.mxu0 0.0
    %517 = vmatpush.msra.mxu0 0.0
    %518 = vmatpush.msra.mxu0 0.0
    %519 = vmatpush.msra.mxu0 0.0
    %520 = vmatpush.msra.mxu0 0.0
    %521 = vmatpush.msra.mxu0 0.0
    %522 = vmatpush.msra.mxu0 %v449
    %523 = vmatpush.msra.mxu0 %v448
    %524 = vmatpush.msra.mxu0 %v447
    %525 = vmatpush.msra.mxu0 %v446
    %526 = vmatmul.f32.gmra.mxu0 %v87
    %v527 = vpop.f32.mrf.mxu0
    %v528 = vadd.f32 %v509, %v527
    %529 = vmatmul.f32.gmra.mxu0 %v90
    %v530 = vpop.f32.mrf.mxu0
    %v531 = vadd.f32 %v509, %v530
    %532 = vdwg.mxu0
    %v534 = vsel %vm139, %v480, 0
    %v537 = vsel %vm139, %v504, 0
    %539 = vmatpush.xpose.msra.mxu0 0.0
    %540 = vmatpush.xpose.msra.mxu0 0.0
    %541 = vmatpush.xpose.msra.mxu0 0.0
    %542 = vmatpush.xpose.msra.mxu0 0.0
    %543 = vmatpush.xpose.msra.mxu0 0.0
    %544 = vmatpush.xpose.msra.mxu0 0.0
    %545 = vmatpush.xpose.msra.mxu0 0.0
    %546 = vmatpush.xpose.msra.mxu0 0.0
    %547 = vmatpush.xpose.msra.mxu0 0.0
    %548 = vmatpush.xpose.msra.mxu0 0.0
    %549 = vmatpush.xpose.msra.mxu0 0.0
    %550 = vmatpush.xpose.msra.mxu0 0.0
    %551 = vmatpush.xpose.msra.mxu0 0.0
    %552 = vmatpush.xpose.msra.mxu0 0.0
    %553 = vmatpush.xpose.msra.mxu0 0.0
    %554 = vmatpush.xpose.msra.mxu0 %v537
    %555 = vmatmul.f32.gmra.mxu0 %v534
    %v556 = vpop.f32.mrf.mxu0
    %v557 = vadd.f32 0.0, %v556
    %558 = vdwg.mxu0
    %v559 = vsel %vm166, %v557, -inf
    %560 = vmax.xlane.f32.xlu0 %v559
    %v561 = vpop.xlane.xlu0 %560
    %v562 = vsub.f32 %v557, %v561
    %v563 = vmul.f32 %v562, 1.442695
    %v564 = vpow.pop %v563
    %v565 = vsel %vm166, %v564, 0.0
    %566 = vadd.xlane.f32.xlu0 %v565
    %v567 = vpop.xlane.xlu0 %566
    %v568 = vrcp.pop %v567
    %v569 = vmul.f32 %v564, %v568
    %v571 = vsel %vm166, %v569, 0
    %573 = vmatpush.msra.mxu0 0.0
    %574 = vmatpush.msra.mxu0 0.0
    %575 = vmatpush.msra.mxu0 0.0
    %576 = vmatpush.msra.mxu0 0.0
    %577 = vmatpush.msra.mxu0 0.0
    %578 = vmatpush.msra.mxu0 0.0
    %579 = vmatpush.msra.mxu0 0.0
    %580 = vmatpush.msra.mxu0 0.0
    %581 = vmatpush.msra.mxu0 0.0
    %582 = vmatpush.msra.mxu0 0.0
    %583 = vmatpush.msra.mxu0 0.0
    %584 = vmatpush.msra.mxu0 0.0
    %585 = vmatpush.msra.mxu0 0.0
    %586 = vmatpush.msra.mxu0 0.0
    %587 = vmatpush.msra.mxu0 0.0
    %588 = vmatpush.msra.mxu0 %v528
    %589 = vmatmul.f32.gmra.mxu0 %v571
    %v590 = vpop.f32.mrf.mxu0
    %v591 = vadd.f32 0.0, %v590
    %592 = vdwg.mxu0
    %593 = vrot.lane.b32.xlu0 %v480, 112
    %v594 = vpop.permute.xlu0 %593
    %595 = vrot.lane.b32.xlu0 %v504, 112
    %v596 = vpop.permute.xlu0 %595
    %v597 = vsel %vm139, %v594, 0
    %v599 = vsel %vm139, %v596, 0
    %601 = vmatpush.xpose.msra.mxu0 0.0
    %602 = vmatpush.xpose.msra.mxu0 0.0
    %603 = vmatpush.xpose.msra.mxu0 0.0
    %604 = vmatpush.xpose.msra.mxu0 0.0
    %605 = vmatpush.xpose.msra.mxu0 0.0
    %606 = vmatpush.xpose.msra.mxu0 0.0
    %607 = vmatpush.xpose.msra.mxu0 0.0
    %608 = vmatpush.xpose.msra.mxu0 0.0
    %609 = vmatpush.xpose.msra.mxu0 0.0
    %610 = vmatpush.xpose.msra.mxu0 0.0
    %611 = vmatpush.xpose.msra.mxu0 0.0
    %612 = vmatpush.xpose.msra.mxu0 0.0
    %613 = vmatpush.xpose.msra.mxu0 0.0
    %614 = vmatpush.xpose.msra.mxu0 0.0
    %615 = vmatpush.xpose.msra.mxu0 0.0
    %616 = vmatpush.xpose.msra.mxu0 %v599
    %617 = vmatmul.f32.gmra.mxu0 %v597
    %v618 = vpop.f32.mrf.mxu0
    %v619 = vadd.f32 0.0, %v618
    %620 = vdwg.mxu0
    %v621 = vsel %vm166, %v619, -inf
    %622 = vmax.xlane.f32.xlu0 %v621
    %v623 = vpop.xlane.xlu0 %622
    %v624 = vsub.f32 %v619, %v623
    %v625 = vmul.f32 %v624, 1.442695
    %v626 = vpow.pop %v625
    %v627 = vsel %vm166, %v626, 0.0
    %628 = vadd.xlane.f32.xlu0 %v627
    %v629 = vpop.xlane.xlu0 %628
    %v630 = vrcp.pop %v629
    %v631 = vmul.f32 %v626, %v630
    %633 = vrot.lane.b32.xlu0 %v528, 112
    %v634 = vpop.permute.xlu0 %633
    %v637 = vsel %vm166, %v631, 0
    %639 = vmatpush.msra.mxu0 0.0
    %640 = vmatpush.msra.mxu0 0.0
    %641 = vmatpush.msra.mxu0 0.0
    %642 = vmatpush.msra.mxu0 0.0
    %643 = vmatpush.msra.mxu0 0.0
    %644 = vmatpush.msra.mxu0 0.0
    %645 = vmatpush.msra.mxu0 0.0
    %646 = vmatpush.msra.mxu0 0.0
    %647 = vmatpush.msra.mxu0 0.0
    %648 = vmatpush.msra.mxu0 0.0
    %649 = vmatpush.msra.mxu0 0.0
    %650 = vmatpush.msra.mxu0 0.0
    %651 = vmatpush.msra.mxu0 0.0
    %652 = vmatpush.msra.mxu0 0.0
    %653 = vmatpush.msra.mxu0 0.0
    %654 = vmatpush.msra.mxu0 %v634
    %655 = vmatmul.f32.gmra.mxu0 %v637
    %v656 = vpop.f32.mrf.mxu0
    %v657 = vadd.f32 0.0, %v656
    %658 = vdwg.mxu0
    %660 = vrot.lane.b32.xlu0 %v657, 16
    %v661 = vpop.permute.xlu0 %660
    %v663 = vsel %vm139, %v591, %v661
    %v665 = vsel %vm139, %v483, 0
    %v668 = vsel %vm139, %v507, 0
    %670 = vmatpush.xpose.msra.mxu0 0.0
    %671 = vmatpush.xpose.msra.mxu0 0.0
    %672 = vmatpush.xpose.msra.mxu0 0.0
    %673 = vmatpush.xpose.msra.mxu0 0.0
    %674 = vmatpush.xpose.msra.mxu0 0.0
    %675 = vmatpush.xpose.msra.mxu0 0.0
    %676 = vmatpush.xpose.msra.mxu0 0.0
    %677 = vmatpush.xpose.msra.mxu0 0.0
    %678 = vmatpush.xpose.msra.mxu0 0.0
    %679 = vmatpush.xpose.msra.mxu0 0.0
    %680 = vmatpush.xpose.msra.mxu0 0.0
    %681 = vmatpush.xpose.msra.mxu0 0.0
    %682 = vmatpush.xpose.msra.mxu0 0.0
    %683 = vmatpush.xpose.msra.mxu0 0.0
    %684 = vmatpush.xpose.msra.mxu0 0.0
    %685 = vmatpush.xpose.msra.mxu0 %v668
    %686 = vmatmul.f32.gmra.mxu0 %v665
    %v687 = vpop.f32.mrf.mxu0
    %v688 = vadd.f32 0.0, %v687
    %689 = vdwg.mxu0
    %v690 = vsel %vm166, %v688, -inf
    %691 = vmax.xlane.f32.xlu0 %v690
    %v692 = vpop.xlane.xlu0 %691
    %v693 = vsub.f32 %v688, %v692
    %v694 = vmul.f32 %v693, 1.442695
    %v695 = vpow.pop %v694
    %v696 = vsel %vm166, %v695, 0.0
    %697 = vadd.xlane.f32.xlu0 %v696
    %v698 = vpop.xlane.xlu0 %697
    %v699 = vrcp.pop %v698
    %v700 = vmul.f32 %v695, %v699
    %v702 = vsel %vm166, %v700, 0
    %704 = vmatpush.msra.mxu0 0.0
    %705 = vmatpush.msra.mxu0 0.0
    %706 = vmatpush.msra.mxu0 0.0
    %707 = vmatpush.msra.mxu0 0.0
    %708 = vmatpush.msra.mxu0 0.0
    %709 = vmatpush.msra.mxu0 0.0
    %710 = vmatpush.msra.mxu0 0.0
    %711 = vmatpush.msra.mxu0 0.0
    %712 = vmatpush.msra.mxu0 0.0
    %713 = vmatpush.msra.mxu0 0.0
    %714 = vmatpush.msra.mxu0 0.0
    %715 = vmatpush.msra.mxu0 0.0
    %716 = vmatpush.msra.mxu0 0.0
    %717 = vmatpush.msra.mxu0 0.0
    %718 = vmatpush.msra.mxu0 0.0
    %719 = vmatpush.msra.mxu0 %v531
    %720 = vmatmul.f32.gmra.mxu0 %v702
    %v721 = vpop.f32.mrf.mxu0
    %v722 = vadd.f32 0.0, %v721
    %723 = vdwg.mxu0
    %724 = vrot.lane.b32.xlu0 %v483, 112
    %v725 = vpop.permute.xlu0 %724
    %726 = vrot.lane.b32.xlu0 %v507, 112
    %v727 = vpop.permute.xlu0 %726
    %v728 = vsel %vm139, %v725, 0
    %v730 = vsel %vm139, %v727, 0
    %732 = vmatpush.xpose.msra.mxu0 0.0
    %733 = vmatpush.xpose.msra.mxu0 0.0
    %734 = vmatpush.xpose.msra.mxu0 0.0
    %735 = vmatpush.xpose.msra.mxu0 0.0
    %736 = vmatpush.xpose.msra.mxu0 0.0
    %737 = vmatpush.xpose.msra.mxu0 0.0
    %738 = vmatpush.xpose.msra.mxu0 0.0
    %739 = vmatpush.xpose.msra.mxu0 0.0
    %740 = vmatpush.xpose.msra.mxu0 0.0
    %741 = vmatpush.xpose.msra.mxu0 0.0
    %742 = vmatpush.xpose.msra.mxu0 0.0
    %743 = vmatpush.xpose.msra.mxu0 0.0
    %744 = vmatpush.xpose.msra.mxu0 0.0
    %745 = vmatpush.xpose.msra.mxu0 0.0
    %746 = vmatpush.xpose.msra.mxu0 0.0
    %747 = vmatpush.xpose.msra.mxu0 %v730
    %748 = vmatmul.f32.gmra.mxu0 %v728
    %v749 = vpop.f32.mrf.mxu0
    %v750 = vadd.f32 0.0, %v749
    %751 = vdwg.mxu0
    %v752 = vsel %vm166, %v750, -inf
    %753 = vmax.xlane.f32.xlu0 %v752
    %v754 = vpop.xlane.xlu0 %753
    %v755 = vsub.f32 %v750, %v754
    %v756 = vmul.f32 %v755, 1.442695
    %v757 = vpow.pop %v756
    %v758 = vsel %vm166, %v757, 0.0
    %759 = vadd.xlane.f32.xlu0 %v758
    %v760 = vpop.xlane.xlu0 %759
    %v761 = vrcp.pop %v760
    %v762 = vmul.f32 %v757, %v761
    %764 = vrot.lane.b32.xlu0 %v531, 112
    %v765 = vpop.permute.xlu0 %764
    %v768 = vsel %vm166, %v762, 0
    %770 = vmatpush.msra.mxu0 0.0
    %771 = vmatpush.msra.mxu0 0.0
    %772 = vmatpush.msra.mxu0 0.0
    %773 = vmatpush.msra.mxu0 0.0
    %774 = vmatpush.msra.mxu0 0.0
    %775 = vmatpush.msra.mxu0 0.0
    %776 = vmatpush.msra.mxu0 0.0
    %777 = vmatpush.msra.mxu0 0.0
    %778 = vmatpush.msra.mxu0 0.0
    %779 = vmatpush.msra.mxu0 0.0
    %780 = vmatpush.msra.mxu0 0.0
    %781 = vmatpush.msra.mxu0 0.0
    %782 = vmatpush.msra.mxu0 0.0
    %783 = vmatpush.msra.mxu0 0.0
    %784 = vmatpush.msra.mxu0 0.0
    %785 = vmatpush.msra.mxu0 %v765
    %786 = vmatmul.f32.gmra.mxu0 %v768
    %v787 = vpop.f32.mrf.mxu0
    %v788 = vadd.f32 0.0, %v787
    %789 = vdwg.mxu0
    %791 = vrot.lane.b32.xlu0 %v788, 16
    %v792 = vpop.permute.xlu0 %791
    %v794 = vsel %vm139, %v722, %v792
    %v795 = vperm.slane %v35, 7
    %v797 = vsel %vm55, %v663, 0
    %v800 = vsel %vm55, %v794, 0
    %802 = vmatpush.msra.mxu0 0.0
    %803 = vmatpush.msra.mxu0 0.0
    %804 = vmatpush.msra.mxu0 0.0
    %805 = vmatpush.msra.mxu0 0.0
    %806 = vmatpush.msra.mxu0 0.0
    %807 = vmatpush.msra.mxu0 0.0
    %808 = vmatpush.msra.mxu0 0.0
    %809 = vmatpush.msra.mxu0 0.0
    %810 = vmatpush.msra.mxu0 0.0
    %811 = vmatpush.msra.mxu0 0.0
    %812 = vmatpush.msra.mxu0 0.0
    %813 = vmatpush.msra.mxu0 0.0
    %814 = vmatpush.msra.mxu0 %v453
    %815 = vmatpush.msra.mxu0 %v452
    %816 = vmatpush.msra.mxu0 %v451
    %817 = vmatpush.msra.mxu0 %v450
    %818 = vmatmul.f32.gmra.mxu0 %v797
    %v819 = vpop.f32.mrf.mxu0
    %v820 = vadd.f32 %v795, %v819
    %821 = vmatmul.f32.gmra.mxu0 %v800
    %v822 = vpop.f32.mrf.mxu0
    %v823 = vadd.f32 %v795, %v822
    %824 = vdwg.mxu0
    %v825 = vstv %s454
    %v826 = vmul.f32 %v825, %v436
    %v827 = vmul.f32 %v825, %v437
    %v828 = vadd.f32 %v826, %v820
    %v829 = vadd.f32 %v827, %v823
    %v830 = vld [vmem:[%s3 + $0x100] sm:$0xff]
    %v831 = vld [vmem:[%s3 + $0x108] sm:$0xff]
    %v832 = vld [vmem:[%s3 + $0x110] sm:$0xff]
    %v833 = vld [vmem:[%s3 + $0x118] sm:$0xff]
    %v834 = vperm.slane %v36, 0
    %v836 = vsel %vm55, %v828, 0
    %v839 = vsel %vm55, %v829, 0
    %841 = vmatpush.msra.mxu0 0.0
    %842 = vmatpush.msra.mxu0 0.0
    %843 = vmatpush.msra.mxu0 0.0
    %844 = vmatpush.msra.mxu0 0.0
    %845 = vmatpush.msra.mxu0 0.0
    %846 = vmatpush.msra.mxu0 0.0
    %847 = vmatpush.msra.mxu0 0.0
    %848 = vmatpush.msra.mxu0 0.0
    %849 = vmatpush.msra.mxu0 0.0
    %850 = vmatpush.msra.mxu0 0.0
    %851 = vmatpush.msra.mxu0 0.0
    %852 = vmatpush.msra.mxu0 0.0
    %853 = vmatpush.msra.mxu0 %v833
    %854 = vmatpush.msra.mxu0 %v832
    %855 = vmatpush.msra.mxu0 %v831
    %856 = vmatpush.msra.mxu0 %v830
    %857 = vmatmul.f32.gmra.mxu0 %v836
    %v858 = vpop.f32.mrf.mxu0
    %v859 = vadd.f32 %v834, %v858
    %860 = vmatmul.f32.gmra.mxu0 %v839
    %v861 = vpop.f32.mrf.mxu0
    %v862 = vadd.f32 %v834, %v861
    %863 = vdwg.mxu0
    %v864 = vmax.f32 %v859, 0.0
    %v865 = vmax.f32 %v862, 0.0
    %v866 = vld [vmem:[%s3 + $0x120] sm:$0xff]
    %v867 = vld [vmem:[%s3 + $0x128] sm:$0xff]
    %v868 = vld [vmem:[%s3 + $0x130] sm:$0xff]
    %v869 = vld [vmem:[%s3 + $0x138] sm:$0xff]
    %v870 = vperm.slane %v36, 1
    %v872 = vsel %vm55, %v864, 0
    %v875 = vsel %vm55, %v865, 0
    %877 = vmatpush.msra.mxu0 0.0
    %878 = vmatpush.msra.mxu0 0.0
    %879 = vmatpush.msra.mxu0 0.0
    %880 = vmatpush.msra.mxu0 0.0
    %881 = vmatpush.msra.mxu0 0.0
    %882 = vmatpush.msra.mxu0 0.0
    %883 = vmatpush.msra.mxu0 0.0
    %884 = vmatpush.msra.mxu0 0.0
    %885 = vmatpush.msra.mxu0 0.0
    %886 = vmatpush.msra.mxu0 0.0
    %887 = vmatpush.msra.mxu0 0.0
    %888 = vmatpush.msra.mxu0 0.0
    %889 = vmatpush.msra.mxu0 %v869
    %890 = vmatpush.msra.mxu0 %v868
    %891 = vmatpush.msra.mxu0 %v867
    %892 = vmatpush.msra.mxu0 %v866
    %893 = vmatmul.f32.gmra.mxu0 %v872
    %v894 = vpop.f32.mrf.mxu0
    %v895 = vadd.f32 %v870, %v894
    %896 = vmatmul.f32.gmra.mxu0 %v875
    %v897 = vpop.f32.mrf.mxu0
    %v898 = vadd.f32 %v870, %v897
    %899 = vdwg.mxu0
    %v900 = vadd.f32 %v31, %v33
    %v901 = vadd.f32 %v32, %v34
    %v902 = vmul.f32 %v900, 0.5
    %v903 = vmul.f32 %v901, 0.5
    %v904 = vadd.f32 %v895, %v902
    %v905 = vadd.f32 %v898, %v903
    %906 = vst.msk [vmem:[#allocation5] sm:$0xff] %vm55, %v904
    %907 = vst.msk [vmem:[#allocation5 + $0x8] sm:$0xff] %vm55, %v905
    // Predicated region
    $region22: #{tpu_custom_call.1} parent=1 // pred_check
      _
    $region23: #{tpu_custom_call.1} parent=1 // pred_check_branch
      %909 = sbr.rel (0) target = $region25
    $region24: #{tpu_custom_call.1} parent=1 // pred_region
      %911 = vsyncadd [#allocation3], 0
      %s912 = sshll.u32 [#allocation5], 4
      %s913 = int_to_ptr.vmem [resolvable:$true] %s912
      %s914 = sshll.u32 %s4, 4
      %s915 = int_to_ptr.hbm [resolvable:$true] %s914
      %920 = dma.vmem_to_hbm [thread:$0]  %s913, 256, %s915, [#allocation3], 128, 128, 8
    $region25: #{tpu_custom_call.1} parent=1 // pred_fallthru
      _
    // Predicated region
    $region26: #{tpu_custom_call.1} parent=1 // pred_check
      _
    $region27: #{tpu_custom_call.1} parent=1 // pred_check_branch
      %922 = sbr.rel (0) target = $region29
    $region28: #{tpu_custom_call.1} parent=1 // pred_region
      %924 = dma.done [#allocation3], 256
    $region29: #{tpu_custom_call.1} parent=1 // pred_fallthru
      _
    %925 = vsyncpa [#allocation3], 1
    %926 = vsyncpa [#allocation4], 1

</llo_original>
